<compile_context>
chip_gen: v7x
topology: tpu7x:2x2x1
jax: 0.10.0
libtpu: 0.0.40
codegen_flags: <defaults>
</compile_context>

<pallas_src>
import jax
import jax.numpy as jnp
from jax.experimental import pallas as pl
from jax.experimental.pallas import tpu as pltpu


# ---------------------------------------------------------------------------
# Pallas kernel: lane-dense patch-embedding matmul + bias + ReLU
# ---------------------------------------------------------------------------
def _patch_embed_kernel(w_ref, p_ref, b_ref, o_ref):
    # w_ref: (N, K)  bf16 flattened conv weight (constant index_map -> stays in VMEM)
    # p_ref: (K, TM) bf16 patches tile, M on the lane axis (lane-dense loads)
    # b_ref: (N, 1)  f32 bias
    # o_ref: (N, TM) f32 output tile (lane-dense, already NCHW-ordered)
    acc = jnp.dot(w_ref[...], p_ref[...], preferred_element_type=jnp.float32)
    acc = acc + b_ref[...]
    o_ref[...] = jnp.maximum(acc, 0.0).astype(o_ref.dtype)


def _choose_tm(M, cap=2048):
    """Lane-axis tile for M: a multiple of 128 dividing M, capped (v7x-safe).

    v6e/v5e (128 MiB VMEM) tolerate a larger cap (4096-8192); 2048 keeps
    double-buffered tiles well under v7x's 32 MiB scoped default.
    """
    if M % 128 != 0 or M <= 128:
        return M            # small / odd image: single full-M block (legal: full dim)
    tm = cap
    while tm >= 128:
        if M % tm == 0:
            return tm
        tm //= 2
    return M


def patch_embed_pallas(patches_km, weight_nk, bias_n1):
    """patches_km: [B, K, M] bf16, weight_nk: [N, K] bf16, bias_n1: [N, 1] f32
    -> [B, N, M] f32 (ReLU(W @ P + b) per batch)."""
    B, K, M = patches_km.shape
    N = weight_nk.shape[0]
    TM = _choose_tm(M)
    grid = (B, M // TM)
    return pl.pallas_call(
        _patch_embed_kernel,
        out_shape=jax.ShapeDtypeStruct((B, N, M), jnp.float32),
        grid_spec=pltpu.PrefetchScalarGridSpec(
            num_scalar_prefetch=0,
            grid=grid,
            in_specs=[
                pl.BlockSpec((N, K), lambda b, mt: (0, 0)),           # weight (VMEM-resident)
                pl.BlockSpec((None, K, TM), lambda b, mt: (b, 0, mt)),  # patches tile
                pl.BlockSpec((N, 1), lambda b, mt: (0, 0)),           # bias
            ],
            out_specs=pl.BlockSpec((None, N, TM), lambda b, mt: (b, 0, mt)),
        ),
        compiler_params=pltpu.CompilerParams(
            dimension_semantics=("parallel", "parallel"),
        ),
    )(weight_nk, patches_km, bias_n1)


# ---------------------------------------------------------------------------
# VisionEncoder forward
# ---------------------------------------------------------------------------
class VisionEncoderPallas:
    """Synthetic EffNet-stem vision encoder.

    input_type='rgb': slices input to first 3 channels (as in the PyTorch
    module), then applies a patch-embedding conv (k=stride=downsample)
    producing [B, out_channels, H/downsample, W/downsample] features.
    """

    def __init__(self, in_channels=3, out_channels=32, downsample=4,
                 input_type="rgb", seed=0):
        self.input_type = input_type
        self.inC = 3 if input_type == "rgb" else in_channels
        self.outC = out_channels
        self.ds = downsample
        kw, kb = jax.random.split(jax.random.PRNGKey(seed))
        fan_in = self.inC * self.ds * self.ds
        # conv weight [outC, inC, ds, ds]; pre-flatten to (N, K) once at init
        # (K ordered (c, kh, kw)) and pre-cast to bf16 for the MXU.
        w4 = jax.random.normal(kw, (self.outC, self.inC, self.ds, self.ds),
                               dtype=jnp.float32) * (1.0 / jnp.sqrt(fan_in))
        self.weight_nk = w4.reshape(self.outC, fan_in)                  # (N, K) f32
        self.weight_nk_bf16 = self.weight_nk.astype(jnp.bfloat16)       # (N, K) bf16
        self.bias = (jax.random.normal(kb, (self.outC, 1), dtype=jnp.float32)
                     * 0.01)                                            # (N, 1) f32

    def __call__(self, img):
        # img: [B, C, H, W] NCHW
        B, C, H, W = img.shape
        if self.input_type == "rgb":
            img = img[:, :3, :, :]
        ds = self.ds
        Hp, Wp = H // ds, W // ds
        M = Hp * Wp
        K = self.inC * ds * ds
        # im2col glue (pure JAX) in bf16, K-major with M on the lane axis:
        # patches[b, (c*ds+kh)*ds+kw, hp*Wp+wp] = img[b, c, hp*ds+kh, wp*ds+kw]
        x = img.astype(jnp.bfloat16).reshape(B, self.inC, Hp, ds, Wp, ds)
        x = jnp.transpose(x, (0, 1, 3, 5, 2, 4))          # B, C, kh, kw, Hp, Wp
        patches = x.reshape(B, K, M)                      # [B, K, M] bf16
        feats = patch_embed_pallas(patches, self.weight_nk_bf16, self.bias)
        # feats is [B, outC, M] -> NCHW feature map with a free reshape.
        return feats.reshape(B, self.outC, Hp, Wp)


if __name__ == "__main__":
    key = jax.random.PRNGKey(0)
    # Small shapes consistent with the module's forward (B, C, H, W); RGBD input
    # that the 'rgb' path slices down to 3 channels.
    B, C, H, W = 2, 4, 16, 16
    img = jax.random.normal(key, (B, C, H, W), dtype=jnp.float32)

    enc = VisionEncoderPallas(in_channels=3, out_channels=32, downsample=4,
                              input_type="rgb", seed=0)
    out = enc(img)
    out = jax.block_until_ready(out)

    # Reference check with plain JAX (same bf16-rounded inputs, f32 math).
    ds = 4
    Hp, Wp = H // ds, W // ds
    x = img[:, :3].astype(jnp.bfloat16).astype(jnp.float32)
    x = x.reshape(B, 3, Hp, ds, Wp, ds)
    x = jnp.transpose(x, (0, 1, 3, 5, 2, 4)).reshape(B, 3 * ds * ds, Hp * Wp)
    w = enc.weight_nk_bf16.astype(jnp.float32)
    ref = jnp.einsum("nk,bkm->bnm", w, x,
                     precision=jax.lax.Precision.HIGHEST) + enc.bias[None]
    ref = jnp.maximum(ref, 0.0).reshape(B, 32, Hp, Wp)

    assert out.shape == (B, 32, Hp, Wp), out.shape
    max_err = float(jnp.max(jnp.abs(out - ref)))
    assert jnp.allclose(out, ref, atol=5e-3, rtol=5e-3), f"mismatch: {max_err}"

    print("KERNEL_OK")
</pallas_src>

<mosaic_0001>
module attributes {stable_mosaic.version = 11 : i64} {
  func.func @_patch_embed_kernel(%arg0: i32, %arg1: i32, %arg2: memref<32x48xbf16, #tpu.memory_space<vmem>>, %arg3: memref<1x48x16xbf16, #tpu.memory_space<vmem>>, %arg4: memref<32x1xf32, #tpu.memory_space<vmem>>, %arg5: memref<1x32x16xf32, #tpu.memory_space<vmem>>) attributes {dimension_semantics = [#tpu.dimension_semantics<parallel>, #tpu.dimension_semantics<parallel>], iteration_bounds = array<i64: 2, 1>, scalar_prefetch = 0 : i64, scratch_operands = 0 : i64, tpu.core_type = #tpu.core_type<tc>, window_params = [{pipeline_mode = #tpu.pipeline_mode<synchronous>, transform_indices = @transform_0, window_bounds = array<i64: 32, 48>}, {transform_indices = @transform_1, window_bounds = array<i64: 1, 48, 16>}, {pipeline_mode = #tpu.pipeline_mode<synchronous>, transform_indices = @transform_2, window_bounds = array<i64: 32, 1>}, {transform_indices = @transform_3, window_bounds = array<i64: 1, 32, 16>}]} {
    %c0 = arith.constant 0 : index
    %c0_0 = arith.constant 0 : index
    %0 = vector.load %arg2[%c0, %c0_0] : memref<32x48xbf16, #tpu.memory_space<vmem>>, vector<32x48xbf16>
    %c0_1 = arith.constant 0 : index
    %c0_2 = arith.constant 0 : index
    %c0_3 = arith.constant 0 : index
    %1 = vector.load %arg3[%c0_1, %c0_2, %c0_3] : memref<1x48x16xbf16, #tpu.memory_space<vmem>>, vector<1x48x16xbf16>
    %2 = vector.shape_cast %1 : vector<1x48x16xbf16> to vector<48x16xbf16>
    %cst = arith.constant dense<0.000000e+00> : vector<32x16xf32>
    %3 = tpu.matmul %0, %2, %cst {dimension_numbers = #tpu.dot_dimension_numbers<[1], [0], [0], [1], [0, 0, 1, 1], [], []>} : vector<32x48xbf16>, vector<48x16xbf16>, vector<32x16xf32> -> vector<32x16xf32>
    %c0_4 = arith.constant 0 : index
    %c0_5 = arith.constant 0 : index
    %4 = vector.load %arg4[%c0_4, %c0_5] : memref<32x1xf32, #tpu.memory_space<vmem>>, vector<32x1xf32>
    %5 = vector.broadcast %4 : vector<32x1xf32> to vector<32x16xf32>
    %6 = arith.addf %3, %5 : vector<32x16xf32>
    %cst_6 = arith.constant 0.000000e+00 : f32
    %7 = vector.broadcast %cst_6 : f32 to vector<32x16xf32>
    %8 = arith.maximumf %6, %7 : vector<32x16xf32>
    %c0_7 = arith.constant 0 : index
    %c0_8 = arith.constant 0 : index
    %c0_9 = arith.constant 0 : index
    %9 = vector.load %arg5[%c0_7, %c0_8, %c0_9] : memref<1x32x16xf32, #tpu.memory_space<vmem>>, vector<1x32x16xf32>
    %10 = vector.shape_cast %9 : vector<1x32x16xf32> to vector<32x16xf32>
    %11 = vector.shape_cast %8 : vector<32x16xf32> to vector<1x32x16xf32>
    tpu.vector_store %arg5[%c0_7, %c0_8, %c0_9], %11 {strides = array<i32>} : memref<1x32x16xf32, #tpu.memory_space<vmem>>, vector<1x32x16xf32>,
    return
  }
  func.func @transform_0(%arg0: i32, %arg1: i32) -> (i32, i32) {
    %c0_i32 = arith.constant 0 : i32
    %c0_i32_0 = arith.constant 0 : i32
    %c0_i32_1 = arith.constant 0 : i32
    return %c0_i32, %c0_i32_0 : i32, i32
  }
  func.func @transform_1(%arg0: i32, %arg1: i32) -> (i32, i32, i32) {
    %c0_i32 = arith.constant 0 : i32
    %c0_i32_0 = arith.constant 0 : i32
    return %arg0, %c0_i32, %arg1 : i32, i32, i32
  }
  func.func @transform_2(%arg0: i32, %arg1: i32) -> (i32, i32) {
    %c0_i32 = arith.constant 0 : i32
    %c0_i32_0 = arith.constant 0 : i32
    %c0_i32_1 = arith.constant 0 : i32
    return %c0_i32, %c0_i32_0 : i32, i32
  }
  func.func @transform_3(%arg0: i32, %arg1: i32) -> (i32, i32, i32) {
    %c0_i32 = arith.constant 0 : i32
    %c0_i32_0 = arith.constant 0 : i32
    return %arg0, %c0_i32, %arg1 : i32, i32, i32
  }
}

</mosaic_0001>

<llo_original>
// kernel: tpu_custom_call.1
$region0: #{tpu_custom_call.1}
  #allocation0 [shape = 'u32[]', space=smem, size = 0x4, offset = 0x4, fixed_abs, tag = 'smem constant byte address 0x4 - core index']
  #allocation1 [shape = 'u32[144,128]{1,0:T(1,128)}', space=vmem, size = 0x12000, scoped, tag = 'internal scratch']
  %s0 = inlined_call_operand.vmem [shape: bf16[32,48], index: 0, kind: input, shape index: {}]
  %s1 = inlined_call_operand.vmem [shape: bf16[2,48,16], index: 1, kind: input, shape index: {}]
  %s2 = inlined_call_operand.vmem [shape: f32[32,1], index: 2, kind: input, shape index: {}]
  %s3 = inlined_call_operand.vmem [shape: f32[2,32,16], index: 3, kind: output, shape index: {}]
  %s4 = sld [smem:[#allocation0]]
  $region45: #{tpu_custom_call.1} parent=0
    _
  %s6 = ssub.s32 1, %s4
  %s7 = scalar_select 0, %s6, %s4
  loop: start=0, step=1, limit=4
  $region2: #{tpu_custom_call.1} parent=0 // loop_pre_header
    _
  $region3: #{tpu_custom_call.1} parent=0 // loop_header
    %s9 = sphi 0, %s13
    %p10 = scmp.ge.s32.totalorder %s9, 4
    %s16 = sphi 0, %s28
    %s17 = sphi 0, %s24
    %s18 = sphi 0, %s16
    %s19 = sphi 0, %s17
    %s20 = sphi 0, %s18
    %s21 = sphi 0, %s19
    %s29 = sphi 0, %s29
    %s31 = sphi 0, %s29
    %s32 = sphi 0, %s31
    %s46 = sphi 0, %s32
    %s54 = sphi 0, %s56
    %s57 = sphi 0, %s54
    %s58 = sphi 0, %s57
    %s74 = sphi 0, %s58
    %s78 = sphi 0, %s78
    %s80 = sphi 0, %s78
    %s81 = sphi 0, %s80
    %s95 = sphi 0, %s81
    %s103 = sphi 0, %s105
    %s106 = sphi 0, %s103
    %s107 = sphi 0, %s106
    %s123 = sphi 0, %s107
  $region4: #{tpu_custom_call.1} parent=0 // loop_header_branch
    %12 = sbr.rel (%p10) target = $region8
  $region5: #{tpu_custom_call.1} parent=0 // loop_body
    %s14 = ssub.s32 %s9, 1
    %s15 = ssub.s32 %s9, 2
    %s22 = sadd.s32 1, %s17
    %p23 = scmp.ge.s32.totalorder %s22, 1
    %s24 = scalar_select %p23, 0, %s22
    %s25 = sadd.s32 1, %s16
    %s26 = scalar_select %p23, %s25, %s16
    %p27 = scmp.ge.s32.totalorder %s26, 2
    %s28 = scalar_select %p27, 0, %s26
    %s30 = sadd.s32 %s29, 1
    %p33 = scmp.eq.s32.totalorder %s9, 1
    %p34 = scmp.ne.s32.totalorder %s29, %s31
    %p35 = scmp.eq.s32.totalorder %s9, 0
    %p36 = por %p34, %p35
    %p37 = scmp.ne.s32.totalorder %s29, %s31
    %p38 = scmp.eq.s32.totalorder %s14, 1
    %p39 = por %p37, %p38
    %p40 = scmp.ne.s32.totalorder %s31, %s32
    %p41 = scmp.eq.s32.totalorder %s14, 0
    %p42 = por %p40, %p41
    %p43 = scmp.ne.s32.totalorder %s31, %s32
    %p44 = scmp.eq.s32.totalorder %s15, 1
    %p45 = por %p43, %p44
    %p47 = scmp.ne.s32.totalorder %s32, %s46
    %p48 = scmp.eq.s32.totalorder %s15, 0
    %p49 = por %p47, %p48
    %s50 = ssub.s32 %s16, %s28
    %s51 = ssub.s32 %s17, %s24
    %s52 = sor.u32 %s50, %s51
    %p53 = scmp.eq.s32.totalorder %s52, 0
    %s55 = sadd.s32 %s54, 1
    %s56 = scalar_select %p53, %s54, %s55
    %p59 = pneg %p53
    %p60 = scmp.eq.s32.totalorder %s9, 1
    %p61 = por %p59, %p60
    %p62 = scmp.ne.s32.totalorder %s54, %s57
    %p63 = scmp.eq.s32.totalorder %s9, 0
    %p64 = por %p62, %p63
    %p65 = scmp.ne.s32.totalorder %s54, %s57
    %p66 = scmp.eq.s32.totalorder %s14, 1
    %p67 = por %p65, %p66
    %p68 = scmp.ne.s32.totalorder %s57, %s58
    %p69 = scmp.eq.s32.totalorder %s14, 0
    %p70 = por %p68, %p69
    %p71 = scmp.ne.s32.totalorder %s57, %s58
    %p72 = scmp.eq.s32.totalorder %s15, 1
    %p73 = por %p71, %p72
    %p75 = scmp.ne.s32.totalorder %s58, %s74
    %p76 = scmp.eq.s32.totalorder %s15, 0
    %p77 = por %p75, %p76
    %s79 = sadd.s32 %s78, 1
    %p82 = scmp.eq.s32.totalorder %s9, 1
    %p83 = scmp.ne.s32.totalorder %s78, %s80
    %p84 = scmp.eq.s32.totalorder %s9, 0
    %p85 = por %p83, %p84
    %p86 = scmp.ne.s32.totalorder %s78, %s80
    %p87 = scmp.eq.s32.totalorder %s14, 1
    %p88 = por %p86, %p87
    %p89 = scmp.ne.s32.totalorder %s80, %s81
    %p90 = scmp.eq.s32.totalorder %s14, 0
    %p91 = por %p89, %p90
    %p92 = scmp.ne.s32.totalorder %s80, %s81
    %p93 = scmp.eq.s32.totalorder %s15, 1
    %p94 = por %p92, %p93
    %p96 = scmp.ne.s32.totalorder %s81, %s95
    %p97 = scmp.eq.s32.totalorder %s15, 0
    %p98 = por %p96, %p97
    %s99 = ssub.s32 %s16, %s28
    %s100 = ssub.s32 %s17, %s24
    %s101 = sor.u32 %s99, %s100
    %p102 = scmp.eq.s32.totalorder %s101, 0
    %s104 = sadd.s32 %s103, 1
    %s105 = scalar_select %p102, %s103, %s104
    %p108 = pneg %p102
    %p109 = scmp.eq.s32.totalorder %s9, 1
    %p110 = por %p108, %p109
    %p111 = scmp.ne.s32.totalorder %s103, %s106
    %p112 = scmp.eq.s32.totalorder %s9, 0
    %p113 = por %p111, %p112
    %p114 = scmp.ne.s32.totalorder %s103, %s106
    %p115 = scmp.eq.s32.totalorder %s14, 1
    %p116 = por %p114, %p115
    %p117 = scmp.ne.s32.totalorder %s106, %s107
    %p118 = scmp.eq.s32.totalorder %s14, 0
    %p119 = por %p117, %p118
    %p120 = scmp.ne.s32.totalorder %s106, %s107
    %p121 = scmp.eq.s32.totalorder %s15, 1
    %p122 = por %p120, %p121
    %p124 = scmp.ne.s32.totalorder %s107, %s123
    %p125 = scmp.eq.s32.totalorder %s15, 0
    %p126 = por %p124, %p125
    %p127 = scmp.le.s32.totalorder 1, %s9
    %p128 = scmp.lt.s32.totalorder %s9, 3
    %p129 = pnand %p127, %p128
    %p130 = pneg %p129
    // Predicated region
    $region9: #{tpu_custom_call.1} parent=5 // pred_check
      _
    $region10: #{tpu_custom_call.1} parent=5 // pred_check_branch
      %132 = sbr.rel (%p129) target = $region12
    $region11: #{tpu_custom_call.1} parent=5 // pred_region
      %s133 = ssub.s32 %s9, 1
      // Predicated region
      $region13: #{tpu_custom_call.1} parent=11 // pred_check
        %p134 = pneg %p42
      $region14: #{tpu_custom_call.1} parent=11 // pred_check_branch
        %136 = sbr.rel (%p134) target = $region16
      $region15: #{tpu_custom_call.1} parent=11 // pred_region
        _
      $region16: #{tpu_custom_call.1} parent=11 // pred_fallthru
        _
      // Predicated region
      $region17: #{tpu_custom_call.1} parent=11 // pred_check
        %p137 = pneg %p91
      $region18: #{tpu_custom_call.1} parent=11 // pred_check_branch
        %139 = sbr.rel (%p137) target = $region20
      $region19: #{tpu_custom_call.1} parent=11 // pred_region
        _
      $region20: #{tpu_custom_call.1} parent=11 // pred_fallthru
        _
    $region12: #{tpu_custom_call.1} parent=5 // pred_fallthru
      _
    %p140 = scmp.lt.s32.totalorder %s9, 2
    // Predicated region
    $region21: #{tpu_custom_call.1} parent=5 // pred_check
      %p141 = pneg %p140
    $region22: #{tpu_custom_call.1} parent=5 // pred_check_branch
      %143 = sbr.rel (%p141) target = $region24
    $region23: #{tpu_custom_call.1} parent=5 // pred_region
      // Predicated region
      $region25: #{tpu_custom_call.1} parent=23 // pred_check
        %p144 = pneg %p64
      $region26: #{tpu_custom_call.1} parent=23 // pred_check_branch
        %146 = sbr.rel (%p144) target = $region28
      $region27: #{tpu_custom_call.1} parent=23 // pred_region
        %p147 = scmp.lt.s32.totalorder %s16, 1
        %s148 = scalar_select %p147, %s16, 1
        %p149 = scmp.lt.s32.totalorder %s17, 0
        %s150 = scalar_select %p149, %s17, 0
        %s151 = smul.addr %s148, 6
        %s152 = sadd.s32 %s150, %s151
        %s153 = smul.addr %s152, 4
        %s154 = scalar_lea.vmem %s1, %s153
      $region28: #{tpu_custom_call.1} parent=23 // pred_fallthru
        _
    $region24: #{tpu_custom_call.1} parent=5 // pred_fallthru
      _
    %p155 = scmp.le.s32.totalorder 1, %s9
    %p156 = scmp.lt.s32.totalorder %s9, 3
    %p157 = pnand %p155, %p156
    %p158 = pneg %p157
    // Predicated region
    $region29: #{tpu_custom_call.1} parent=5 // pred_check
      _
    $region30: #{tpu_custom_call.1} parent=5 // pred_check_branch
      %160 = sbr.rel (%p157) target = $region32
    $region31: #{tpu_custom_call.1} parent=5 // pred_region
      %s161 = ssub.s32 %s9, 1
      %p162 = pneg %p42
      %p163 = pneg %p39
      %p164 = scmp.lt.s32.totalorder %s18, 1
      %s165 = scalar_select %p164, %s18, 1
      %p166 = scmp.lt.s32.totalorder %s19, 0
      %s167 = scalar_select %p166, %s19, 0
      %s168 = smul.addr %s165, 6
      %s169 = sadd.s32 %s167, %s168
      %s170 = smul.addr %s169, 4
      %s171 = scalar_lea.vmem %s1, %s170
      %p172 = pneg %p70
      %p173 = pneg %p67
      %p174 = pneg %p91
      %p175 = pneg %p88
      %p176 = pneg %p119
      %p177 = pneg %p116
      %p178 = scmp.lt.s32.totalorder %s18, 1
      %s179 = scalar_select %p178, %s18, 1
      %p180 = scmp.lt.s32.totalorder %s19, 0
      %s181 = scalar_select %p180, %s19, 0
      %s182 = smul.addr %s179, 4
      %s183 = sadd.s32 %s181, %s182
      %s184 = smul.addr %s183, 8
      %s185 = scalar_lea.vmem %s3, %s184
      %p186 = scmp.lt.s32.totalorder %s18, 1
      %s187 = scalar_select %p186, %s18, 1
      %p188 = scmp.lt.s32.totalorder %s19, 0
      %s189 = scalar_select %p188, %s19, 0
      %s190 = smul.addr %s187, 6
      %s191 = sadd.s32 %s189, %s190
      %s192 = smul.addr %s191, 4
      %s193 = scalar_lea.vmem %s1, %s192
      %p194 = scmp.lt.s32.totalorder %s18, 1
      %s195 = scalar_select %p194, %s18, 1
      %p196 = scmp.lt.s32.totalorder %s19, 0
      %s197 = scalar_select %p196, %s19, 0
      %s198 = smul.addr %s195, 4
      %s199 = sadd.s32 %s197, %s198
      %s200 = smul.addr %s199, 8
      %s201 = scalar_lea.vmem %s3, %s200
      %v203 = vld [vmem:[%s0] sm:$0xf]
      %v204 = vld [vmem:[%s0 + $0x4] sm:$0xf]
      %v205 = vld [vmem:[%s0 + $0x8] sm:$0xf]
      %v206 = vld [vmem:[%s0 + $0xc] sm:$0xf]
      %v207 = vld [vmem:[%s193] sm:$0xf]
      %v208 = vld [vmem:[%s193 + $0x4] sm:$0xf]
      %v209 = vld [vmem:[%s193 + $0x8] sm:$0xf]
      %v210 = vld [vmem:[%s193 + $0xc] sm:$0xf]
      %v211 = vld [vmem:[%s193 + $0x10] sm:$0xf]
      %v212 = vld [vmem:[%s193 + $0x14] sm:$0xf]
      %v213 = vld [vmem:[%s2] sm:$0xff]
      %v214 = vld [vmem:[%s2 + $0x8] sm:$0xff]
      %v215 = vld [vmem:[%s2 + $0x10] sm:$0xff]
      %v216 = vld [vmem:[%s2 + $0x18] sm:$0xff]
      %218 = vset.pattern.permute.xlu0 0
      %219 = vperm.xlu0 %218, %v213
      %v220 = vpop.permute.xlu0 %219
      %223 = vset.pattern.permute.xlu0 0
      %224 = vperm.xlu0 %223, %v214
      %v225 = vpop.permute.xlu0 %224
      %228 = vset.pattern.permute.xlu0 0
      %229 = vperm.xlu0 %228, %v215
      %v230 = vpop.permute.xlu0 %229
      %233 = vset.pattern.permute.xlu0 0
      %234 = vperm.xlu0 %233, %v216
      %v235 = vpop.permute.xlu0 %234
      %v241 = vunpack.c.l.b16 %v203
      %v242 = vunpack.c.l.b16 %v204
      %v243 = vunpack.c.l.b16 %v205
      %v244 = vunpack.c.l.b16 %v206
      %v245 = vpack.c.b16 %v242, %v241
      %v246 = vpack.c.b16 %v244, %v243
      %v253 = vunpack.c.l.b16 %v207
      %v254 = vunpack.c.l.b16 %v208
      %v255 = vunpack.c.l.b16 %v209
      %v256 = vunpack.c.l.b16 %v210
      %v257 = vunpack.c.l.b16 %v211
      %v258 = vunpack.c.l.b16 %v212
      %v259 = vpack.c.b16 %v254, %v253
      %v260 = vpack.c.b16 %v256, %v255
      %v261 = vpack.c.b16 %v258, %v257
      %vm265 = vcmask 392192
      %v267 = vsel %vm265, %v245, 0
      %v270 = vsel %vm265, %v246, 0
      %272 = vmatprep.subr.bf16.mxu0 0
      %273 = vmatpush1.bf16.msra.mxu0 %v259
      %274 = vmatprep.subr.bf16.mxu0 0
      %275 = vmatpush1.bf16.msra.mxu0 %v260
      %276 = vmatprep.subr.bf16.mxu0 0
      %277 = vmatpush1.bf16.msra.mxu0 %v261
      %278 = vmatprep.subr.bf16.mxu0 0
      %279 = vmatpush1.bf16.msra.mxu0 0
      %280 = vmatprep.subr.bf16.mxu0 0
      %281 = vmatpush1.bf16.msra.mxu0 0
      %282 = vmatprep.subr.bf16.mxu0 0
      %283 = vmatpush1.bf16.msra.mxu0 0
      %284 = vmatprep.subr.bf16.mxu0 0
      %285 = vmatpush1.bf16.msra.mxu0 0
      %286 = vmatprep.subr.bf16.mxu0 0
      %287 = vmatpush1.bf16.msra.mxu0 0
      %288 = vmatprep.subr.bf16.mxu0 0
      %289 = vmatpush1.bf16.msra.mxu0 0
      %290 = vmatprep.subr.bf16.mxu0 0
      %291 = vmatpush1.bf16.msra.mxu0 0
      %292 = vmatprep.subr.bf16.mxu0 0
      %293 = vmatpush1.bf16.msra.mxu0 0
      %294 = vmatprep.subr.bf16.mxu0 0
      %295 = vmatpush1.bf16.msra.mxu0 0
      %296 = vmatprep.subr.bf16.mxu0 0
      %297 = vmatpush1.bf16.msra.mxu0 0
      %298 = vmatprep.subr.bf16.mxu0 0
      %299 = vmatpush1.bf16.msra.mxu0 0
      %300 = vmatprep.subr.bf16.mxu0 0
      %301 = vmatpush1.bf16.msra.mxu0 0
      %302 = vmatprep.subr.bf16.mxu0 0
      %303 = vmatpush1.bf16.msra.mxu0 0
      %304 = vmatprep.mubr.bf16.mxu0 0
      %305 = vmatmul.mubr.bf16.gmra.mrb[0].mxu0 %v267
      %v306 = vpop.f32.mrb[0].mxu0
      %v307 = vadd.f32 %v220, %v306
      %v308 = vpop.f32.mrb[0].mxu0
      %v309 = vpop.f32.mrb[0].mxu0
      %v310 = vadd.f32 %v225, %v309
      %v311 = vpop.f32.mrb[0].mxu0
      %312 = vmatprep.mubr.bf16.mxu0 0
      %313 = vmatmul.mubr.bf16.gmra.mrb[0].mxu0 %v270
      %v314 = vpop.f32.mrb[0].mxu0
      %v315 = vadd.f32 %v230, %v314
      %v316 = vpop.f32.mrb[0].mxu0
      %v317 = vpop.f32.mrb[0].mxu0
      %v318 = vadd.f32 %v235, %v317
      %v319 = vpop.f32.mrb[0].mxu0
      %320 = vdwg.mxu0
      %v321 = vmax.f32 %v307, 0.0
      %v322 = vmax.f32 %v310, 0.0
      %v323 = vmax.f32 %v315, 0.0
      %v324 = vmax.f32 %v318, 0.0
      %vm325 = vcmask 130048
      %326 = vst.msk [vmem:[%s201] sm:$0xff] %vm325, %v321
      %327 = vst.msk [vmem:[%s201 + $0x8] sm:$0xff] %vm325, %v322
      %328 = vst.msk [vmem:[%s201 + $0x10] sm:$0xff] %vm325, %v323
      %329 = vst.msk [vmem:[%s201 + $0x18] sm:$0xff] %vm325, %v324
      %p330 = scmp.lt.s32.totalorder %s18, 1
      %s331 = scalar_select %p330, %s18, 1
      %p332 = scmp.lt.s32.totalorder %s19, 0
      %s333 = scalar_select %p332, %s19, 0
      %s334 = smul.addr %s331, 4
      %s335 = sadd.s32 %s333, %s334
      %s336 = smul.addr %s335, 8
      %s337 = scalar_lea.vmem %s3, %s336
      // Predicated region
      $region33: #{tpu_custom_call.1} parent=31 // pred_check
        %p338 = pneg %p116
      $region34: #{tpu_custom_call.1} parent=31 // pred_check_branch
        %340 = sbr.rel (%p338) target = $region36
      $region35: #{tpu_custom_call.1} parent=31 // pred_region
        _
      $region36: #{tpu_custom_call.1} parent=31 // pred_fallthru
        _
    $region32: #{tpu_custom_call.1} parent=5 // pred_fallthru
      _
    %p341 = scmp.le.s32.totalorder 2, %s9
    // Predicated region
    $region37: #{tpu_custom_call.1} parent=5 // pred_check
      %p342 = pneg %p341
    $region38: #{tpu_custom_call.1} parent=5 // pred_check_branch
      %344 = sbr.rel (%p342) target = $region40
    $region39: #{tpu_custom_call.1} parent=5 // pred_region
      %s345 = ssub.s32 %s9, 2
      // Predicated region
      $region41: #{tpu_custom_call.1} parent=39 // pred_check
        %p346 = pneg %p122
      $region42: #{tpu_custom_call.1} parent=39 // pred_check_branch
        %348 = sbr.rel (%p346) target = $region44
      $region43: #{tpu_custom_call.1} parent=39 // pred_region
        %p349 = scmp.lt.s32.totalorder %s20, 1
        %s350 = scalar_select %p349, %s20, 1
        %p351 = scmp.lt.s32.totalorder %s21, 0
        %s352 = scalar_select %p351, %s21, 0
        %s353 = smul.addr %s350, 4
        %s354 = sadd.s32 %s352, %s353
        %s355 = smul.addr %s354, 8
        %s356 = scalar_lea.vmem %s3, %s355
      $region44: #{tpu_custom_call.1} parent=39 // pred_fallthru
        _
    $region40: #{tpu_custom_call.1} parent=5 // pred_fallthru
      _
  $region6: #{tpu_custom_call.1} parent=0 // loop_footer
    %s13 = sadd.s32 1, %s9
  $region7: #{tpu_custom_call.1} parent=0 // loop_footer_branch
    %8 = sbr.rel target = $region3
  $region8: #{tpu_custom_call.1} parent=0 // loop_exit
    _

</llo_original>
